<compile_context>
chip_gen: v5e
topology: v5e:2x2
jax: 0.10.0
libtpu: 0.0.40
codegen_flags: <defaults>
</compile_context>

<pallas_src>
import jax
import jax.numpy as jnp
from jax.experimental import pallas as pl
from jax.experimental.pallas import tpu as pltpu


# ---------------------------------------------------------------------------
# Kernel: one (tile_b, D) x (D, H) matmul + bias add, f32 accumulation.
# ---------------------------------------------------------------------------
def fused_cross_modal_kernel(image_ref, w_ref, b_ref, out_ref):
    acc = jnp.dot(image_ref[...], w_ref[...], preferred_element_type=jnp.float32)
    out_ref[...] = (acc + b_ref[...]).astype(out_ref.dtype)


# ---------------------------------------------------------------------------
# One-time parameter fusion (amortized across calls).
#   kv  = image @ Wi^T + bi            (image_proj)
#   v   = kv    @ Wv^T + bv            (MHA value proj; softmax over len-1 == 1)
#   out = v     @ Wo^T + bo            (MHA out_proj)
#   =>  out = image @ (Wi^T Wv^T Wo^T) + ((bi Wv^T + bv) Wo^T + bo)
# ---------------------------------------------------------------------------
def fuse_cross_modal_params(p, weights_dtype=jnp.bfloat16):
    w_fused = (p["wi"].T @ p["wv"].T) @ p["wo"].T                    # (image_dim, hidden)
    b_fused = (p["bi"] @ p["wv"].T + p["bv"]) @ p["wo"].T + p["bo"]  # (hidden,)
    return {
        "w": jnp.asarray(w_fused, weights_dtype),
        "b": jnp.asarray(b_fused, jnp.float32)[None, :],  # bias stays f32 (f32 acc add)
    }


def _round_up(x, m):
    return ((x + m - 1) // m) * m


def _pick_tile_b(B, max_tile=1024, min_tile=128):
    """Batch tile: big enough to amortize per-step overhead, small enough to
    leave >= 2 grid steps (v7x megacore) when B is large."""
    if B <= min_tile:
        return max(8, _round_up(B, 8))          # one small (possibly ragged) block
    return min(max_tile, max(min_tile, _round_up(pl.cdiv(B, 2), 8)))


def _resident_spec(shape):
    """Constant-index block (weight/bias): single-buffered, stays VMEM-resident."""
    try:
        return pl.BlockSpec(shape, lambda i: (0,) * len(shape),
                            pipeline_mode=pl.Buffered(1))
    except TypeError:  # older jax without pipeline_mode kwarg
        return pl.BlockSpec(shape, lambda i: (0,) * len(shape))


# ---------------------------------------------------------------------------
# Wrapper.  text_feat is accepted for API fidelity with the PyTorch forward,
# but with seq_len == 1 the output is provably independent of it.
# ---------------------------------------------------------------------------
def cross_modal_attention(text_feat, image_feat, fused_params, *,
                          tile_b=1024, min_pallas_batch=128):
    del text_feat  # dead path: softmax over a length-1 key axis is exactly 1.

    w = fused_params["w"]
    b = fused_params["b"]
    B, D = image_feat.shape
    H = w.shape[1]
    out_dtype = image_feat.dtype

    # Narrow the data path when bf16 weights are used (f32 acc kept in-kernel).
    x = image_feat
    if w.dtype == jnp.bfloat16 and x.dtype == jnp.float32:
        x = x.astype(jnp.bfloat16)

    # Tiny-batch dispatch: launch + weight DMA dominate; let XLA fuse the GEMM.
    if B < min_pallas_batch:
        return (jnp.dot(x, w, preferred_element_type=jnp.float32) + b).astype(out_dtype)

    tb = _pick_tile_b(B, max_tile=tile_b)
    grid = (pl.cdiv(B, tb),)                     # ragged last block is masked

    # VMEM budget: double-buffered activation + output tiles, resident weight/bias.
    act_bytes = tb * D * jnp.dtype(x.dtype).itemsize
    out_bytes = tb * H * jnp.dtype(out_dtype).itemsize
    w_bytes = D * H * jnp.dtype(w.dtype).itemsize
    vmem_needed = 2 * act_bytes + 2 * out_bytes + w_bytes + H * 4
    vmem_limit = int(min(max(2 * vmem_needed, 32 << 20), 48 << 20))

    cost = pl.CostEstimate(
        flops=2 * B * D * H,
        transcendentals=0,
        bytes_accessed=(B * D * jnp.dtype(x.dtype).itemsize
                        + w_bytes + H * 4
                        + B * H * jnp.dtype(out_dtype).itemsize),
    )

    return pl.pallas_call(
        fused_cross_modal_kernel,
        out_shape=jax.ShapeDtypeStruct((B, H), out_dtype),
        grid=grid,
        in_specs=[
            pl.BlockSpec((tb, D), lambda i: (i, 0)),  # activation tile (pipelined)
            _resident_spec((D, H)),                   # fused weight (VMEM-resident)
            _resident_spec((1, H)),                   # fused bias   (VMEM-resident)
        ],
        out_specs=pl.BlockSpec((tb, H), lambda i: (i, 0)),
        compiler_params=pltpu.CompilerParams(
            dimension_semantics=("parallel",),
            vmem_limit_bytes=vmem_limit,
        ),
        cost_estimate=cost,
    )(x, w, b)


# ---------------------------------------------------------------------------
# Pure-JAX reference matching the PyTorch module exactly (including the dead
# q/k/softmax path), used to validate the fused kernel.
# ---------------------------------------------------------------------------
def reference(text_feat, image_feat, p, num_heads=4):
    q_in = text_feat @ p["wt"].T + p["bt"]
    kv_in = image_feat @ p["wi"].T + p["bi"]
    q = q_in @ p["wq"].T + p["bq"]
    k = kv_in @ p["wk"].T + p["bk"]
    v = kv_in @ p["wv"].T + p["bv"]
    B, H = q.shape
    hd = H // num_heads
    qh = q.reshape(B, num_heads, hd) / jnp.sqrt(hd).astype(jnp.float32)
    kh = k.reshape(B, num_heads, hd)
    vh = v.reshape(B, num_heads, hd)
    s = jnp.sum(qh * kh, axis=-1, keepdims=True)     # (B, nh, 1): seq len 1
    wgt = jax.nn.softmax(s, axis=-1)                 # identically 1
    attn = (wgt * vh).reshape(B, H)
    return attn @ p["wo"].T + p["bo"]


def make_params(key, text_dim, image_dim, hidden_dim):
    """Deterministic synthetic parameters with PyTorch-style (out, in) weights."""
    keys = jax.random.split(key, 8)

    def lin(kw, kb, out_dim, in_dim):
        w = jax.random.normal(kw, (out_dim, in_dim), jnp.float32) * 0.02
        b = jax.random.normal(kb, (out_dim,), jnp.float32) * 0.02
        return w, b

    wt, bt = lin(keys[0], keys[1], hidden_dim, text_dim)
    wi, bi = lin(keys[2], keys[3], hidden_dim, image_dim)
    # nn.MultiheadAttention in_proj_weight is (3*hidden, hidden); split q/k/v.
    in_proj_w = jax.random.normal(keys[4], (3 * hidden_dim, hidden_dim), jnp.float32) * 0.02
    in_proj_b = jax.random.normal(keys[5], (3 * hidden_dim,), jnp.float32) * 0.02
    wq, wk, wv = jnp.split(in_proj_w, 3, axis=0)
    bq, bk, bv = jnp.split(in_proj_b, 3, axis=0)
    wo, bo = lin(keys[6], keys[7], hidden_dim, hidden_dim)

    return dict(wt=wt, bt=bt, wi=wi, bi=bi,
                wq=wq, bq=bq, wk=wk, bk=bk, wv=wv, bv=bv,
                wo=wo, bo=bo)


if __name__ == "__main__":
    B = 4
    text_dim, image_dim, hidden_dim, num_heads = 768, 512, 256, 4

    key = jax.random.PRNGKey(0)
    k_text, k_img, k_params = jax.random.split(key, 3)
    text_feat = jax.random.normal(k_text, (B, text_dim), jnp.float32)
    image_feat = jax.random.normal(k_img, (B, image_dim), jnp.float32)
    params = make_params(k_params, text_dim, image_dim, hidden_dim)

    ref = reference(text_feat, image_feat, params, num_heads=num_heads)

    # --- f32 fused weights: force the Pallas path (min_pallas_batch=0) and
    #     validate bit-tight against the full reference. ---------------------
    fused_f32 = fuse_cross_modal_params(params, weights_dtype=jnp.float32)
    out = cross_modal_attention(text_feat, image_feat, fused_f32,
                                min_pallas_batch=0)
    out = jax.block_until_ready(out)
    assert out.shape == (B, hidden_dim)
    assert jnp.allclose(out, ref, atol=1e-4, rtol=1e-4), "f32 kernel mismatch"

    # --- bf16 fused weights + bf16 activation path (default), looser check. -
    fused_bf16 = fuse_cross_modal_params(params, weights_dtype=jnp.bfloat16)
    out_bf16 = cross_modal_attention(text_feat, image_feat, fused_bf16,
                                     min_pallas_batch=0)
    out_bf16 = jax.block_until_ready(out_bf16)
    assert jnp.allclose(out_bf16, ref, atol=1e-2, rtol=1e-2), "bf16 kernel mismatch"

    # --- tiny-batch XLA dispatch path (default threshold) must also match. --
    out_xla = jax.block_until_ready(
        cross_modal_attention(text_feat, image_feat, fused_f32))
    assert jnp.allclose(out_xla, ref, atol=1e-4, rtol=1e-4), "XLA fallback mismatch"

    print("KERNEL_OK")
</pallas_src>

<mosaic_0001>
module attributes {stable_mosaic.version = 11 : i64} {
  func.func @fused_cross_modal_kernel(%arg0: i32, %arg1: memref<8x512xf32, #tpu.memory_space<vmem>>, %arg2: memref<512x256xf32, #tpu.memory_space<vmem>>, %arg3: memref<1x256xf32, #tpu.memory_space<vmem>>, %arg4: memref<8x256xf32, #tpu.memory_space<vmem>>) attributes {dimension_semantics = [#tpu.dimension_semantics<parallel>], iteration_bounds = array<i64: 1>, scalar_prefetch = 0 : i64, scratch_operands = 0 : i64, tpu.core_type = #tpu.core_type<tc>, window_params = [{transform_indices = @transform_0, window_bounds = array<i64: 8, 512>}, {pipeline_mode = #tpu.pipeline_mode<synchronous>, transform_indices = @transform_1, window_bounds = array<i64: 512, 256>}, {pipeline_mode = #tpu.pipeline_mode<synchronous>, transform_indices = @transform_2, window_bounds = array<i64: 1, 256>}, {transform_indices = @transform_3, window_bounds = array<i64: 8, 256>}]} {
    %c0 = arith.constant 0 : index
    %c0_0 = arith.constant 0 : index
    %0 = vector.load %arg1[%c0, %c0_0] : memref<8x512xf32, #tpu.memory_space<vmem>>, vector<8x512xf32>
    %c0_1 = arith.constant 0 : index
    %c0_2 = arith.constant 0 : index
    %1 = vector.load %arg2[%c0_1, %c0_2] : memref<512x256xf32, #tpu.memory_space<vmem>>, vector<512x256xf32>
    %cst = arith.constant dense<0.000000e+00> : vector<8x256xf32>
    %2 = tpu.matmul %0, %1, %cst {dimension_numbers = #tpu.dot_dimension_numbers<[1], [0], [0], [1], [0, 0, 1, 1], [], []>} : vector<8x512xf32>, vector<512x256xf32>, vector<8x256xf32> -> vector<8x256xf32>
    %c0_3 = arith.constant 0 : index
    %c0_4 = arith.constant 0 : index
    %3 = vector.load %arg3[%c0_3, %c0_4] : memref<1x256xf32, #tpu.memory_space<vmem>>, vector<1x256xf32>
    %4 = vector.broadcast %3 : vector<1x256xf32> to vector<8x256xf32>
    %5 = arith.addf %2, %4 : vector<8x256xf32>
    %c0_5 = arith.constant 0 : index
    %c0_6 = arith.constant 0 : index
    %6 = vector.load %arg4[%c0_5, %c0_6] : memref<8x256xf32, #tpu.memory_space<vmem>>, vector<8x256xf32>
    tpu.vector_store %arg4[%c0_5, %c0_6], %5 {strides = array<i32>} : memref<8x256xf32, #tpu.memory_space<vmem>>, vector<8x256xf32>,
    return
  }
  func.func @transform_0(%arg0: i32) -> (i32, i32) {
    %c0_i32 = arith.constant 0 : i32
    %c0_i32_0 = arith.constant 0 : i32
    return %arg0, %c0_i32 : i32, i32
  }
  func.func @transform_1(%arg0: i32) -> (i32, i32) {
    %c0_i32 = arith.constant 0 : i32
    %c0_i32_0 = arith.constant 0 : i32
    %c0_i32_1 = arith.constant 0 : i32
    return %c0_i32, %c0_i32_0 : i32, i32
  }
  func.func @transform_2(%arg0: i32) -> (i32, i32) {
    %c0_i32 = arith.constant 0 : i32
    %c0_i32_0 = arith.constant 0 : i32
    %c0_i32_1 = arith.constant 0 : i32
    return %c0_i32, %c0_i32_0 : i32, i32
  }
  func.func @transform_3(%arg0: i32) -> (i32, i32) {
    %c0_i32 = arith.constant 0 : i32
    %c0_i32_0 = arith.constant 0 : i32
    return %arg0, %c0_i32 : i32, i32
  }
}

</mosaic_0001>

<llo_original>
// kernel: tpu_custom_call.1
$region0: #{tpu_custom_call.1}
  #allocation0 [shape = 'u32[]', space=smem, size = 0x4, offset = 0x4, fixed_abs, tag = 'smem constant byte address 0x4 - core index']
  #allocation1 [shape = 'u32[72,128]{1,0:T(1,128)}', space=vmem, size = 0x9000, scoped, tag = 'internal scratch']
  %s0 = inlined_call_operand.hbm [shape: f32[4,512], index: 0, kind: input, shape index: {}]
  %s1 = inlined_call_operand.hbm [shape: f32[512,256], index: 1, kind: input, shape index: {}]
  %s2 = inlined_call_operand.hbm [shape: f32[1,256], index: 2, kind: input, shape index: {}]
  %s3 = inlined_call_operand.hbm [shape: f32[4,256], index: 3, kind: output, shape index: {}]
  %s4 = sld [smem:[#allocation0]]
  $region34: #{tpu_custom_call.1} parent=0
    _
  %s6 = ssub.s32 1, %s4
  %s7 = scalar_select 0, %s6, %s4
  $region1: #{tpu_custom_call.1} parent=0
    #allocation2 [shape = 'u8[16384]{0}', space=vmem, size = 0x4000, scoped, tag = 'input window, operand 0, single buffered']
    #allocation3 [shape = 's32[1]{0}', space=sflag, size = 0x4, scoped, tag = 'scoped memory for tpu_custom_call.1']
    #allocation4 [shape = 's32[1]{0}', space=sflag, size = 0x4, scoped, tag = 'scoped memory for tpu_custom_call.1']
    #allocation5 [shape = 'u8[524288]{0}', space=vmem, size = 0x80000, scoped, tag = 'input window, operand 1, single buffered']
    #allocation6 [shape = 's32[1]{0}', space=sflag, size = 0x4, scoped, tag = 'scoped memory for tpu_custom_call.1']
    #allocation7 [shape = 'u8[1024]{0}', space=vmem, size = 0x400, scoped, tag = 'input window, operand 2, single buffered']
    #allocation8 [shape = 'u8[8192]{0}', space=vmem, size = 0x2000, scoped, tag = 'output window, operand 0, single buffered']
    %8 = vsyncpa [#allocation3], 0
    %9 = vsyncpa [#allocation6], 0
    %10 = vsyncpa [#allocation4], 0
    // Predicated region
    $region2: #{tpu_custom_call.1} parent=1 // pred_check
      _
    $region3: #{tpu_custom_call.1} parent=1 // pred_check_branch
      %12 = sbr.rel (0) target = $region5
    $region4: #{tpu_custom_call.1} parent=1 // pred_region
      %14 = vsyncadd [#allocation3], 256
      %s15 = sshll.u32 %s0, 4
      %s16 = int_to_ptr.hbm [resolvable:$true] %s15
      %s17 = sshll.u32 [#allocation2], 4
      %s18 = int_to_ptr.vmem [resolvable:$true] %s17
      %23 = dma.hbm_to_vmem [thread:$0]  %s16, 256, %s18, [#allocation3], 256, 256, 16
    $region5: #{tpu_custom_call.1} parent=1 // pred_fallthru
      _
    // Predicated region
    $region6: #{tpu_custom_call.1} parent=1 // pred_check
      _
    $region7: #{tpu_custom_call.1} parent=1 // pred_check_branch
      %25 = sbr.rel (0) target = $region9
    $region8: #{tpu_custom_call.1} parent=1 // pred_region
      %27 = vsyncadd [#allocation6], 0
      %s28 = sshll.u32 %s1, 4
      %s29 = int_to_ptr.hbm [resolvable:$true] %s28
      %s30 = sshll.u32 [#allocation5], 4
      %s31 = int_to_ptr.vmem [resolvable:$true] %s30
      %36 = dma.hbm_to_vmem [thread:$0]  %s29, 16384, %s31, [#allocation6], 256, 256, 16
    $region9: #{tpu_custom_call.1} parent=1 // pred_fallthru
      _
    // Predicated region
    $region10: #{tpu_custom_call.1} parent=1 // pred_check
      _
    $region11: #{tpu_custom_call.1} parent=1 // pred_check_branch
      %38 = sbr.rel (0) target = $region13
    $region12: #{tpu_custom_call.1} parent=1 // pred_region
      %40 = vsyncadd [#allocation6], 0
      %s42 = sshll.u32 %s2, 4
      %s43 = int_to_ptr.hbm [resolvable:$true] %s42
      %s44 = sshll.u32 [#allocation7], 4
      %s45 = int_to_ptr.vmem [resolvable:$true] %s44
      %47 = dma.hbm_to_vmem [thread:$0]  %s43, 32, %s45, [#allocation6]
    $region13: #{tpu_custom_call.1} parent=1 // pred_fallthru
      _
    // Predicated region
    $region14: #{tpu_custom_call.1} parent=1 // pred_check
      _
    $region15: #{tpu_custom_call.1} parent=1 // pred_check_branch
      %49 = sbr.rel (0) target = $region17
    $region16: #{tpu_custom_call.1} parent=1 // pred_region
      %51 = dma.done [#allocation3], 512
    $region17: #{tpu_custom_call.1} parent=1 // pred_fallthru
      _
    // Predicated region
    $region18: #{tpu_custom_call.1} parent=1 // pred_check
      _
    $region19: #{tpu_custom_call.1} parent=1 // pred_check_branch
      %53 = sbr.rel (0) target = $region21
    $region20: #{tpu_custom_call.1} parent=1 // pred_region
      %55 = dma.done [#allocation6], 16384
    $region21: #{tpu_custom_call.1} parent=1 // pred_fallthru
      _
    // Predicated region
    $region22: #{tpu_custom_call.1} parent=1 // pred_check
      _
    $region23: #{tpu_custom_call.1} parent=1 // pred_check_branch
      %57 = sbr.rel (0) target = $region25
    $region24: #{tpu_custom_call.1} parent=1 // pred_region
      %59 = dma.done [#allocation6], 32
    $region25: #{tpu_custom_call.1} parent=1 // pred_fallthru
      _
    %v60 = vld [vmem:[#allocation2] sm:$0xff]
    %v61 = vld [vmem:[#allocation2 + $0x8] sm:$0xff]
    %v62 = vld [vmem:[#allocation2 + $0x10] sm:$0xff]
    %v63 = vld [vmem:[#allocation2 + $0x18] sm:$0xff]
    %v64 = vld [vmem:[#allocation5] sm:$0xff]
    %v65 = vld [vmem:[#allocation5 + $0x8] sm:$0xff]
    %v66 = vld [vmem:[#allocation5 + $0x10] sm:$0xff]
    %v67 = vld [vmem:[#allocation5 + $0x18] sm:$0xff]
    %v68 = vld [vmem:[#allocation5 + $0x20] sm:$0xff]
    %v69 = vld [vmem:[#allocation5 + $0x28] sm:$0xff]
    %v70 = vld [vmem:[#allocation5 + $0x30] sm:$0xff]
    %v71 = vld [vmem:[#allocation5 + $0x38] sm:$0xff]
    %v72 = vld [vmem:[#allocation5 + $0x40] sm:$0xff]
    %v73 = vld [vmem:[#allocation5 + $0x48] sm:$0xff]
    %v74 = vld [vmem:[#allocation5 + $0x50] sm:$0xff]
    %v75 = vld [vmem:[#allocation5 + $0x58] sm:$0xff]
    %v76 = vld [vmem:[#allocation5 + $0x60] sm:$0xff]
    %v77 = vld [vmem:[#allocation5 + $0x68] sm:$0xff]
    %v78 = vld [vmem:[#allocation5 + $0x70] sm:$0xff]
    %v79 = vld [vmem:[#allocation5 + $0x78] sm:$0xff]
    %v80 = vld [vmem:[#allocation5 + $0x80] sm:$0xff]
    %v81 = vld [vmem:[#allocation5 + $0x88] sm:$0xff]
    %v82 = vld [vmem:[#allocation5 + $0x90] sm:$0xff]
    %v83 = vld [vmem:[#allocation5 + $0x98] sm:$0xff]
    %v84 = vld [vmem:[#allocation5 + $0xa0] sm:$0xff]
    %v85 = vld [vmem:[#allocation5 + $0xa8] sm:$0xff]
    %v86 = vld [vmem:[#allocation5 + $0xb0] sm:$0xff]
    %v87 = vld [vmem:[#allocation5 + $0xb8] sm:$0xff]
    %v88 = vld [vmem:[#allocation5 + $0xc0] sm:$0xff]
    %v89 = vld [vmem:[#allocation5 + $0xc8] sm:$0xff]
    %v90 = vld [vmem:[#allocation5 + $0xd0] sm:$0xff]
    %v91 = vld [vmem:[#allocation5 + $0xd8] sm:$0xff]
    %v92 = vld [vmem:[#allocation5 + $0xe0] sm:$0xff]
    %v93 = vld [vmem:[#allocation5 + $0xe8] sm:$0xff]
    %v94 = vld [vmem:[#allocation5 + $0xf0] sm:$0xff]
    %v95 = vld [vmem:[#allocation5 + $0xf8] sm:$0xff]
    %v96 = vld [vmem:[#allocation5 + $0x100] sm:$0xff]
    %v97 = vld [vmem:[#allocation5 + $0x108] sm:$0xff]
    %v98 = vld [vmem:[#allocation5 + $0x110] sm:$0xff]
    %v99 = vld [vmem:[#allocation5 + $0x118] sm:$0xff]
    %v100 = vld [vmem:[#allocation5 + $0x120] sm:$0xff]
    %v101 = vld [vmem:[#allocation5 + $0x128] sm:$0xff]
    %v102 = vld [vmem:[#allocation5 + $0x130] sm:$0xff]
    %v103 = vld [vmem:[#allocation5 + $0x138] sm:$0xff]
    %v104 = vld [vmem:[#allocation5 + $0x140] sm:$0xff]
    %v105 = vld [vmem:[#allocation5 + $0x148] sm:$0xff]
    %v106 = vld [vmem:[#allocation5 + $0x150] sm:$0xff]
    %v107 = vld [vmem:[#allocation5 + $0x158] sm:$0xff]
    %v108 = vld [vmem:[#allocation5 + $0x160] sm:$0xff]
    %v109 = vld [vmem:[#allocation5 + $0x168] sm:$0xff]
    %v110 = vld [vmem:[#allocation5 + $0x170] sm:$0xff]
    %v111 = vld [vmem:[#allocation5 + $0x178] sm:$0xff]
    %v112 = vld [vmem:[#allocation5 + $0x180] sm:$0xff]
    %v113 = vld [vmem:[#allocation5 + $0x188] sm:$0xff]
    %v114 = vld [vmem:[#allocation5 + $0x190] sm:$0xff]
    %v115 = vld [vmem:[#allocation5 + $0x198] sm:$0xff]
    %v116 = vld [vmem:[#allocation5 + $0x1a0] sm:$0xff]
    %v117 = vld [vmem:[#allocation5 + $0x1a8] sm:$0xff]
    %v118 = vld [vmem:[#allocation5 + $0x1b0] sm:$0xff]
    %v119 = vld [vmem:[#allocation5 + $0x1b8] sm:$0xff]
    %v120 = vld [vmem:[#allocation5 + $0x1c0] sm:$0xff]
    %v121 = vld [vmem:[#allocation5 + $0x1c8] sm:$0xff]
    %v122 = vld [vmem:[#allocation5 + $0x1d0] sm:$0xff]
    %v123 = vld [vmem:[#allocation5 + $0x1d8] sm:$0xff]
    %v124 = vld [vmem:[#allocation5 + $0x1e0] sm:$0xff]
    %v125 = vld [vmem:[#allocation5 + $0x1e8] sm:$0xff]
    %v126 = vld [vmem:[#allocation5 + $0x1f0] sm:$0xff]
    %v127 = vld [vmem:[#allocation5 + $0x1f8] sm:$0xff]
    %v128 = vld [vmem:[#allocation5 + $0x200] sm:$0xff]
    %v129 = vld [vmem:[#allocation5 + $0x208] sm:$0xff]
    %v130 = vld [vmem:[#allocation5 + $0x210] sm:$0xff]
    %v131 = vld [vmem:[#allocation5 + $0x218] sm:$0xff]
    %v132 = vld [vmem:[#allocation5 + $0x220] sm:$0xff]
    %v133 = vld [vmem:[#allocation5 + $0x228] sm:$0xff]
    %v134 = vld [vmem:[#allocation5 + $0x230] sm:$0xff]
    %v135 = vld [vmem:[#allocation5 + $0x238] sm:$0xff]
    %v136 = vld [vmem:[#allocation5 + $0x240] sm:$0xff]
    %v137 = vld [vmem:[#allocation5 + $0x248] sm:$0xff]
    %v138 = vld [vmem:[#allocation5 + $0x250] sm:$0xff]
    %v139 = vld [vmem:[#allocation5 + $0x258] sm:$0xff]
    %v140 = vld [vmem:[#allocation5 + $0x260] sm:$0xff]
    %v141 = vld [vmem:[#allocation5 + $0x268] sm:$0xff]
    %v142 = vld [vmem:[#allocation5 + $0x270] sm:$0xff]
    %v143 = vld [vmem:[#allocation5 + $0x278] sm:$0xff]
    %v144 = vld [vmem:[#allocation5 + $0x280] sm:$0xff]
    %v145 = vld [vmem:[#allocation5 + $0x288] sm:$0xff]
    %v146 = vld [vmem:[#allocation5 + $0x290] sm:$0xff]
    %v147 = vld [vmem:[#allocation5 + $0x298] sm:$0xff]
    %v148 = vld [vmem:[#allocation5 + $0x2a0] sm:$0xff]
    %v149 = vld [vmem:[#allocation5 + $0x2a8] sm:$0xff]
    %v150 = vld [vmem:[#allocation5 + $0x2b0] sm:$0xff]
    %v151 = vld [vmem:[#allocation5 + $0x2b8] sm:$0xff]
    %v152 = vld [vmem:[#allocation5 + $0x2c0] sm:$0xff]
    %v153 = vld [vmem:[#allocation5 + $0x2c8] sm:$0xff]
    %v154 = vld [vmem:[#allocation5 + $0x2d0] sm:$0xff]
    %v155 = vld [vmem:[#allocation5 + $0x2d8] sm:$0xff]
    %v156 = vld [vmem:[#allocation5 + $0x2e0] sm:$0xff]
    %v157 = vld [vmem:[#allocation5 + $0x2e8] sm:$0xff]
    %v158 = vld [vmem:[#allocation5 + $0x2f0] sm:$0xff]
    %v159 = vld [vmem:[#allocation5 + $0x2f8] sm:$0xff]
    %v160 = vld [vmem:[#allocation5 + $0x300] sm:$0xff]
    %v161 = vld [vmem:[#allocation5 + $0x308] sm:$0xff]
    %v162 = vld [vmem:[#allocation5 + $0x310] sm:$0xff]
    %v163 = vld [vmem:[#allocation5 + $0x318] sm:$0xff]
    %v164 = vld [vmem:[#allocation5 + $0x320] sm:$0xff]
    %v165 = vld [vmem:[#allocation5 + $0x328] sm:$0xff]
    %v166 = vld [vmem:[#allocation5 + $0x330] sm:$0xff]
    %v167 = vld [vmem:[#allocation5 + $0x338] sm:$0xff]
    %v168 = vld [vmem:[#allocation5 + $0x340] sm:$0xff]
    %v169 = vld [vmem:[#allocation5 + $0x348] sm:$0xff]
    %v170 = vld [vmem:[#allocation5 + $0x350] sm:$0xff]
    %v171 = vld [vmem:[#allocation5 + $0x358] sm:$0xff]
    %v172 = vld [vmem:[#allocation5 + $0x360] sm:$0xff]
    %v173 = vld [vmem:[#allocation5 + $0x368] sm:$0xff]
    %v174 = vld [vmem:[#allocation5 + $0x370] sm:$0xff]
    %v175 = vld [vmem:[#allocation5 + $0x378] sm:$0xff]
    %v176 = vld [vmem:[#allocation5 + $0x380] sm:$0xff]
    %v177 = vld [vmem:[#allocation5 + $0x388] sm:$0xff]
    %v178 = vld [vmem:[#allocation5 + $0x390] sm:$0xff]
    %v179 = vld [vmem:[#allocation5 + $0x398] sm:$0xff]
    %v180 = vld [vmem:[#allocation5 + $0x3a0] sm:$0xff]
    %v181 = vld [vmem:[#allocation5 + $0x3a8] sm:$0xff]
    %v182 = vld [vmem:[#allocation5 + $0x3b0] sm:$0xff]
    %v183 = vld [vmem:[#allocation5 + $0x3b8] sm:$0xff]
    %v184 = vld [vmem:[#allocation5 + $0x3c0] sm:$0xff]
    %v185 = vld [vmem:[#allocation5 + $0x3c8] sm:$0xff]
    %v186 = vld [vmem:[#allocation5 + $0x3d0] sm:$0xff]
    %v187 = vld [vmem:[#allocation5 + $0x3d8] sm:$0xff]
    %v188 = vld [vmem:[#allocation5 + $0x3e0] sm:$0xff]
    %v189 = vld [vmem:[#allocation5 + $0x3e8] sm:$0xff]
    %v190 = vld [vmem:[#allocation5 + $0x3f0] sm:$0xff]
    %v191 = vld [vmem:[#allocation5 + $0x3f8] sm:$0xff]
    %v192 = vld [vmem:[#allocation7] sm:$0x3]
    %v194 = vperm.slane %v192, 0
    %v195 = vperm.slane %v192, 1
    %202 = vst [vmem:[#allocation1] ss:$2 sm:$0xff] %v60
    %s203 = scalar_lea.vmem [#allocation1], 1
    %204 = vst [vmem:[%s203] ss:$2 sm:$0xff] %v62
    %s205 = scalar_lea.vmem [#allocation1], 16
    %206 = vst [vmem:[%s205] ss:$2 sm:$0xff] %v61
    %s207 = scalar_lea.vmem [#allocation1], 17
    %208 = vst [vmem:[%s207] ss:$2 sm:$0xff] %v63
    %v209 = vld.sshfl [vmem:[#allocation1] sm:$0xff pattern:$0x75316420]
    %v210 = vld.sshfl [vmem:[#allocation1 + $0x8] sm:$0xff pattern:$0x75316420]
    %v211 = vld.sshfl [vmem:[#allocation1 + $0x10] sm:$0xff pattern:$0x75316420]
    %v212 = vld.sshfl [vmem:[#allocation1 + $0x18] sm:$0xff pattern:$0x75316420]
    %217 = vmatpush.msra.mxu0 %v94
    %218 = vmatpush.msra.mxu0 %v92
    %219 = vmatpush.msra.mxu0 %v90
    %220 = vmatpush.msra.mxu0 %v88
    %221 = vmatpush.msra.mxu0 %v86
    %222 = vmatpush.msra.mxu0 %v84
    %223 = vmatpush.msra.mxu0 %v82
    %224 = vmatpush.msra.mxu0 %v80
    %225 = vmatpush.msra.mxu0 %v78
    %226 = vmatpush.msra.mxu0 %v76
    %227 = vmatpush.msra.mxu0 %v74
    %228 = vmatpush.msra.mxu0 %v72
    %229 = vmatpush.msra.mxu0 %v70
    %230 = vmatpush.msra.mxu0 %v68
    %231 = vmatpush.msra.mxu0 %v66
    %232 = vmatpush.msra.mxu0 %v64
    %233 = vmatmul.f32.gmra.mxu0 %v209
    %v234 = vpop.f32.mrf.mxu0
    %v235 = vadd.f32 %v194, %v234
    %236 = vdwg.mxu0
    %237 = vmatpush.msra.mxu0 %v126
    %238 = vmatpush.msra.mxu0 %v124
    %239 = vmatpush.msra.mxu0 %v122
    %240 = vmatpush.msra.mxu0 %v120
    %241 = vmatpush.msra.mxu0 %v118
    %242 = vmatpush.msra.mxu0 %v116
    %243 = vmatpush.msra.mxu0 %v114
    %244 = vmatpush.msra.mxu0 %v112
    %245 = vmatpush.msra.mxu0 %v110
    %246 = vmatpush.msra.mxu0 %v108
    %247 = vmatpush.msra.mxu0 %v106
    %248 = vmatpush.msra.mxu0 %v104
    %249 = vmatpush.msra.mxu0 %v102
    %250 = vmatpush.msra.mxu0 %v100
    %251 = vmatpush.msra.mxu0 %v98
    %252 = vmatpush.msra.mxu0 %v96
    %253 = vmatmul.f32.gmra.mxu0 %v210
    %v254 = vpop.f32.mrf.mxu0
    %v255 = vadd.f32 %v235, %v254
    %256 = vdwg.mxu0
    %257 = vmatpush.msra.mxu0 %v158
    %258 = vmatpush.msra.mxu0 %v156
    %259 = vmatpush.msra.mxu0 %v154
    %260 = vmatpush.msra.mxu0 %v152
    %261 = vmatpush.msra.mxu0 %v150
    %262 = vmatpush.msra.mxu0 %v148
    %263 = vmatpush.msra.mxu0 %v146
    %264 = vmatpush.msra.mxu0 %v144
    %265 = vmatpush.msra.mxu0 %v142
    %266 = vmatpush.msra.mxu0 %v140
    %267 = vmatpush.msra.mxu0 %v138
    %268 = vmatpush.msra.mxu0 %v136
    %269 = vmatpush.msra.mxu0 %v134
    %270 = vmatpush.msra.mxu0 %v132
    %271 = vmatpush.msra.mxu0 %v130
    %272 = vmatpush.msra.mxu0 %v128
    %273 = vmatmul.f32.gmra.mxu0 %v211
    %v274 = vpop.f32.mrf.mxu0
    %v275 = vadd.f32 %v255, %v274
    %276 = vdwg.mxu0
    %277 = vmatpush.msra.mxu0 %v190
    %278 = vmatpush.msra.mxu0 %v188
    %279 = vmatpush.msra.mxu0 %v186
    %280 = vmatpush.msra.mxu0 %v184
    %281 = vmatpush.msra.mxu0 %v182
    %282 = vmatpush.msra.mxu0 %v180
    %283 = vmatpush.msra.mxu0 %v178
    %284 = vmatpush.msra.mxu0 %v176
    %285 = vmatpush.msra.mxu0 %v174
    %286 = vmatpush.msra.mxu0 %v172
    %287 = vmatpush.msra.mxu0 %v170
    %288 = vmatpush.msra.mxu0 %v168
    %289 = vmatpush.msra.mxu0 %v166
    %290 = vmatpush.msra.mxu0 %v164
    %291 = vmatpush.msra.mxu0 %v162
    %292 = vmatpush.msra.mxu0 %v160
    %293 = vmatmul.f32.gmra.mxu0 %v212
    %v294 = vpop.f32.mrf.mxu0
    %v295 = vadd.f32 %v275, %v294
    %296 = vdwg.mxu0
    %297 = vmatpush.msra.mxu0 %v95
    %298 = vmatpush.msra.mxu0 %v93
    %299 = vmatpush.msra.mxu0 %v91
    %300 = vmatpush.msra.mxu0 %v89
    %301 = vmatpush.msra.mxu0 %v87
    %302 = vmatpush.msra.mxu0 %v85
    %303 = vmatpush.msra.mxu0 %v83
    %304 = vmatpush.msra.mxu0 %v81
    %305 = vmatpush.msra.mxu0 %v79
    %306 = vmatpush.msra.mxu0 %v77
    %307 = vmatpush.msra.mxu0 %v75
    %308 = vmatpush.msra.mxu0 %v73
    %309 = vmatpush.msra.mxu0 %v71
    %310 = vmatpush.msra.mxu0 %v69
    %311 = vmatpush.msra.mxu0 %v67
    %312 = vmatpush.msra.mxu0 %v65
    %313 = vmatmul.f32.gmra.mxu0 %v209
    %v314 = vpop.f32.mrf.mxu0
    %v315 = vadd.f32 %v195, %v314
    %316 = vdwg.mxu0
    %317 = vmatpush.msra.mxu0 %v127
    %318 = vmatpush.msra.mxu0 %v125
    %319 = vmatpush.msra.mxu0 %v123
    %320 = vmatpush.msra.mxu0 %v121
    %321 = vmatpush.msra.mxu0 %v119
    %322 = vmatpush.msra.mxu0 %v117
    %323 = vmatpush.msra.mxu0 %v115
    %324 = vmatpush.msra.mxu0 %v113
    %325 = vmatpush.msra.mxu0 %v111
    %326 = vmatpush.msra.mxu0 %v109
    %327 = vmatpush.msra.mxu0 %v107
    %328 = vmatpush.msra.mxu0 %v105
    %329 = vmatpush.msra.mxu0 %v103
    %330 = vmatpush.msra.mxu0 %v101
    %331 = vmatpush.msra.mxu0 %v99
    %332 = vmatpush.msra.mxu0 %v97
    %333 = vmatmul.f32.gmra.mxu0 %v210
    %v334 = vpop.f32.mrf.mxu0
    %v335 = vadd.f32 %v315, %v334
    %336 = vdwg.mxu0
    %337 = vmatpush.msra.mxu0 %v159
    %338 = vmatpush.msra.mxu0 %v157
    %339 = vmatpush.msra.mxu0 %v155
    %340 = vmatpush.msra.mxu0 %v153
    %341 = vmatpush.msra.mxu0 %v151
    %342 = vmatpush.msra.mxu0 %v149
    %343 = vmatpush.msra.mxu0 %v147
    %344 = vmatpush.msra.mxu0 %v145
    %345 = vmatpush.msra.mxu0 %v143
    %346 = vmatpush.msra.mxu0 %v141
    %347 = vmatpush.msra.mxu0 %v139
    %348 = vmatpush.msra.mxu0 %v137
    %349 = vmatpush.msra.mxu0 %v135
    %350 = vmatpush.msra.mxu0 %v133
    %351 = vmatpush.msra.mxu0 %v131
    %352 = vmatpush.msra.mxu0 %v129
    %353 = vmatmul.f32.gmra.mxu0 %v211
    %v354 = vpop.f32.mrf.mxu0
    %v355 = vadd.f32 %v335, %v354
    %356 = vdwg.mxu0
    %357 = vmatpush.msra.mxu0 %v191
    %358 = vmatpush.msra.mxu0 %v189
    %359 = vmatpush.msra.mxu0 %v187
    %360 = vmatpush.msra.mxu0 %v185
    %361 = vmatpush.msra.mxu0 %v183
    %362 = vmatpush.msra.mxu0 %v181
    %363 = vmatpush.msra.mxu0 %v179
    %364 = vmatpush.msra.mxu0 %v177
    %365 = vmatpush.msra.mxu0 %v175
    %366 = vmatpush.msra.mxu0 %v173
    %367 = vmatpush.msra.mxu0 %v171
    %368 = vmatpush.msra.mxu0 %v169
    %369 = vmatpush.msra.mxu0 %v167
    %370 = vmatpush.msra.mxu0 %v165
    %371 = vmatpush.msra.mxu0 %v163
    %372 = vmatpush.msra.mxu0 %v161
    %373 = vmatmul.f32.gmra.mxu0 %v212
    %v374 = vpop.f32.mrf.mxu0
    %v375 = vadd.f32 %v355, %v374
    %376 = vdwg.mxu0
    %v379 = vrot.slane %v375, 4
    %vm380 = vcmask 1043456
    %v381 = vsel %vm380, %v295, %v379
    %v382 = vsel %vm380, %v379, %v295
    %v383 = vrot.slane %v382, 4
    %386 = vst [vmem:[#allocation8] sm:$0xff] %v381
    %387 = vst [vmem:[#allocation8 + $0x8] sm:$0xff] %v383
    // Predicated region
    $region26: #{tpu_custom_call.1} parent=1 // pred_check
      _
    $region27: #{tpu_custom_call.1} parent=1 // pred_check_branch
      %389 = sbr.rel (0) target = $region29
    $region28: #{tpu_custom_call.1} parent=1 // pred_region
      %391 = vsyncadd [#allocation4], 128
      %s392 = sshll.u32 [#allocation8], 4
      %s393 = int_to_ptr.vmem [resolvable:$true] %s392
      %s394 = sshll.u32 %s3, 4
      %s395 = int_to_ptr.hbm [resolvable:$true] %s394
      %400 = dma.vmem_to_hbm [thread:$0]  %s393, 128, %s395, [#allocation4], 128, 128, 8
    $region29: #{tpu_custom_call.1} parent=1 // pred_fallthru
      _
    // Predicated region
    $region30: #{tpu_custom_call.1} parent=1 // pred_check
      _
    $region31: #{tpu_custom_call.1} parent=1 // pred_check_branch
      %402 = sbr.rel (0) target = $region33
    $region32: #{tpu_custom_call.1} parent=1 // pred_region
      %404 = dma.done [#allocation4], 256
    $region33: #{tpu_custom_call.1} parent=1 // pred_fallthru
      _
    %405 = vsyncpa [#allocation3], 1
    %406 = vsyncpa [#allocation6], 1
    %407 = vsyncpa [#allocation4], 1

</llo_original>
